<compile_context>
chip_gen: v6e
topology: v6e:2x2x1
jax: 0.10.0
libtpu: 0.0.40
codegen_flags: <defaults>
</compile_context>

<pallas_src>
import jax
import jax.numpy as jnp
from jax import lax
from jax.experimental import pallas as pl
from jax.experimental.pallas import tpu as pltpu


def _round_up(n, m):
    return ((n + m - 1) // m) * m


def _make_kernel(chunk):
    """Kernel factory closed over the static inner sub-chunk width (lanes)."""

    def kernel(x_t_ref, w1_ref, b1w2_ref, b2_ref, o_ref):
        # x_t_ref : (K, TM)   batch on the lane axis
        # w1_ref  : (H, K)    PyTorch nn.Linear weight layout [out, in]
        # b1w2_ref: (H, 2)    col 0 = layer-1 bias, col 1 = layer-2 weight column
        # b2_ref  : (1, 1)    layer-2 bias scalar in SMEM
        # o_ref   : (1, TM)   lane-dense output slab
        K, TM = x_t_ref.shape
        w1 = w1_ref[...]
        b1 = b1w2_ref[:, 0:1]
        w2 = b1w2_ref[:, 1:2]
        b2 = b2_ref[0, 0]

        def compute(x_c):
            # ---- Layer 1 on the VPU: K (tiny) broadcast FMAs, no MXU ----
            acc = w1[:, 0:1] * x_c[0:1, :]                        # (H, chunk)
            for k in range(1, K):                                 # static unroll
                acc = acc + w1[:, k:k + 1] * x_c[k:k + 1, :]
            h = jnp.maximum(acc + b1, 0.0)                        # bias + ReLU
            # ---- Layer 2: VPU multiply + sublane (XLU) reduce -----------
            return jnp.sum(h * w2, axis=0, keepdims=True) + b2    # (1, chunk)

        n_full = TM // chunk
        rem = TM - n_full * chunk

        if n_full == 1 and rem == 0:
            # Single sub-chunk: process the whole tile directly.
            o_ref[...] = compute(x_t_ref[...]).astype(o_ref.dtype)
        else:
            if n_full > 0:
                def body(c, carry):
                    off = pl.multiple_of(c * chunk, chunk)
                    x_c = x_t_ref[:, pl.ds(off, chunk)]
                    o_ref[:, pl.ds(off, chunk)] = compute(x_c).astype(o_ref.dtype)
                    return carry
                lax.fori_loop(0, n_full, body, 0, unroll=True)
            if rem > 0:                                           # static, 128-aligned tail
                off = n_full * chunk
                x_c = x_t_ref[:, off:off + rem]
                o_ref[:, off:off + rem] = compute(x_c).astype(o_ref.dtype)

    return kernel


def baseline_forward(x, w1, b1w2, b2, *, tm_max=4096, chunk=512):
    """x: [B, obs_dim] f32; w1: [H, obs_dim]; b1w2: [H, 2] (bias1 | w2 column);
    b2: [1, 1].  Returns [B, 1] = relu(x @ w1.T + b1.T) @ w2 + b2."""
    B, K = x.shape
    H = w1.shape[0]

    # Adaptive 128-aligned tiling: pad lanes to 128, minimize tile padding.
    B128 = _round_up(B, 128)
    n_tiles = max(1, -(-B128 // tm_max))
    TM = _round_up(-(-B128 // n_tiles), 128)
    B_pad = n_tiles * TM

    # Layout plumbing: single fused pad+transpose (zeros in padded columns).
    if B_pad != B:
        x_t = jnp.pad(x, ((0, B_pad - B), (0, 0))).T              # (K, B_pad)
    else:
        x_t = x.T

    kernel = _make_kernel(min(chunk, TM))

    out = pl.pallas_call(
        kernel,
        out_shape=jax.ShapeDtypeStruct((1, B_pad), jnp.float32),
        grid=(n_tiles,),
        in_specs=[
            pl.BlockSpec((K, TM), lambda i: (0, i)),              # x_t tile (streamed)
            pl.BlockSpec((H, K), lambda i: (0, 0)),               # w1 (resident)
            pl.BlockSpec((H, 2), lambda i: (0, 0)),               # [b1 | w2] (resident)
            pl.BlockSpec((1, 1), lambda i: (0, 0),
                         memory_space=pltpu.MemorySpace.SMEM),    # b2 scalar
        ],
        out_specs=pl.BlockSpec((1, TM), lambda i: (0, i)),
        compiler_params=pltpu.CompilerParams(
            dimension_semantics=("parallel",),                    # megacore sharding on v7x
        ),
    )(x_t, w1, b1w2, b2)

    return out[0, :B].reshape(B, 1)


def init_params(key, obs_dim, hidden_dim):
    # PyTorch nn.Linear-style init (uniform +-1/sqrt(fan_in)).
    k1, k2, k3, k4 = jax.random.split(key, 4)
    lim1 = 1.0 / jnp.sqrt(jnp.float32(obs_dim))
    lim2 = 1.0 / jnp.sqrt(jnp.float32(hidden_dim))
    w1 = jax.random.uniform(k1, (hidden_dim, obs_dim), jnp.float32, -lim1, lim1)
    b1 = jax.random.uniform(k2, (hidden_dim, 1), jnp.float32, -lim1, lim1)
    w2 = jax.random.uniform(k3, (hidden_dim, 1), jnp.float32, -lim2, lim2)
    b2 = jax.random.uniform(k4, (1, 1), jnp.float32, -lim2, lim2)
    return w1, b1, w2, b2


def pack_params(b1, w2):
    # Merge layer-1 bias and layer-2 weight column into one resident operand.
    return jnp.concatenate([b1, w2], axis=1)                      # (H, 2)


def _reference(x, w1, b1, w2, b2):
    h = jnp.maximum(x @ w1.T + b1.T, 0.0)
    return h @ w2 + b2


if __name__ == "__main__":
    OBS_DIM, HIDDEN = 4, 32          # CartPole-like sizes

    key = jax.random.PRNGKey(0)
    kx, kp, kx2, kx3 = jax.random.split(key, 4)
    w1, b1, w2, b2 = init_params(kp, OBS_DIM, HIDDEN)
    b1w2 = pack_params(b1, w2)

    # Small batch: single 128-lane tile, one in-kernel chunk.
    B = 8
    x = jax.random.normal(kx, (B, OBS_DIM), dtype=jnp.float32)
    out = jax.block_until_ready(baseline_forward(x, w1, b1w2, b2))
    ref = _reference(x, w1, b1, w2, b2)
    assert out.shape == (B, 1)
    assert jnp.allclose(out, ref, atol=1e-5, rtol=1e-5)

    # Medium batch: single 640-lane tile -> 512-lane chunk + 128-lane tail.
    B2 = 600
    x2 = jax.random.normal(kx2, (B2, OBS_DIM), dtype=jnp.float32)
    out2 = jax.block_until_ready(baseline_forward(x2, w1, b1w2, b2))
    ref2 = _reference(x2, w1, b1, w2, b2)
    assert out2.shape == (B2, 1)
    assert jnp.allclose(out2, ref2, atol=1e-5, rtol=1e-5)

    # Large batch: 2 grid tiles (parallel axis) with inner fori_loop chunks.
    B3 = 5000
    x3 = jax.random.normal(kx3, (B3, OBS_DIM), dtype=jnp.float32)
    out3 = jax.block_until_ready(baseline_forward(x3, w1, b1w2, b2))
    ref3 = _reference(x3, w1, b1, w2, b2)
    assert out3.shape == (B3, 1)
    assert jnp.allclose(out3, ref3, atol=1e-5, rtol=1e-5)

    print("KERNEL_OK")
</pallas_src>

<mosaic_0001>
module attributes {stable_mosaic.version = 11 : i64} {
  func.func @kernel(%arg0: i32, %arg1: memref<4x128xf32, #tpu.memory_space<vmem>>, %arg2: memref<32x4xf32, #tpu.memory_space<vmem>>, %arg3: memref<32x2xf32, #tpu.memory_space<vmem>>, %arg4: memref<1x1xf32, #tpu.memory_space<smem>>, %arg5: memref<1x128xf32, #tpu.memory_space<vmem>>) attributes {dimension_semantics = [#tpu.dimension_semantics<parallel>], iteration_bounds = array<i64: 1>, scalar_prefetch = 0 : i64, scratch_operands = 0 : i64, tpu.core_type = #tpu.core_type<tc>, window_params = [{transform_indices = @transform_0, window_bounds = array<i64: 4, 128>}, {pipeline_mode = #tpu.pipeline_mode<synchronous>, transform_indices = @transform_1, window_bounds = array<i64: 32, 4>}, {pipeline_mode = #tpu.pipeline_mode<synchronous>, transform_indices = @transform_2, window_bounds = array<i64: 32, 2>}, {transform_indices = @transform_3, window_bounds = array<i64: 1, 1>}, {transform_indices = @transform_4, window_bounds = array<i64: 1, 128>}]} {
    %c0 = arith.constant 0 : index
    %c0_0 = arith.constant 0 : index
    %0 = vector.load %arg2[%c0, %c0_0] : memref<32x4xf32, #tpu.memory_space<vmem>>, vector<32x4xf32>
    %c0_1 = arith.constant 0 : index
    %c0_2 = arith.constant 0 : index
    %1 = vector.load %arg3[%c0_1, %c0_2] : memref<32x2xf32, #tpu.memory_space<vmem>>, vector<32x1xf32>
    %c0_3 = arith.constant 0 : index
    %c1 = arith.constant 1 : index
    %2 = vector.load %arg3[%c0_3, %c1] : memref<32x2xf32, #tpu.memory_space<vmem>>, vector<32x1xf32>
    %c0_4 = arith.constant 0 : index
    %c0_5 = arith.constant 0 : index
    %3 = memref.load %arg4[%c0_4, %c0_5] : memref<1x1xf32, #tpu.memory_space<smem>>
    %c0_6 = arith.constant 0 : index
    %c0_7 = arith.constant 0 : index
    %4 = vector.load %arg1[%c0_6, %c0_7] : memref<4x128xf32, #tpu.memory_space<vmem>>, vector<4x128xf32>
    %5 = vector.extract_strided_slice %0 {offsets = [0, 0], sizes = [32, 1], strides = [1, 1]} : vector<32x4xf32> to vector<32x1xf32>
    %6 = vector.extract_strided_slice %4 {offsets = [0, 0], sizes = [1, 128], strides = [1, 1]} : vector<4x128xf32> to vector<1x128xf32>
    %7 = vector.broadcast %5 : vector<32x1xf32> to vector<32x128xf32>
    %8 = vector.broadcast %6 : vector<1x128xf32> to vector<32x128xf32>
    %9 = arith.mulf %7, %8 : vector<32x128xf32>
    %10 = vector.extract_strided_slice %0 {offsets = [0, 1], sizes = [32, 1], strides = [1, 1]} : vector<32x4xf32> to vector<32x1xf32>
    %11 = vector.extract_strided_slice %4 {offsets = [1, 0], sizes = [1, 128], strides = [1, 1]} : vector<4x128xf32> to vector<1x128xf32>
    %12 = vector.broadcast %10 : vector<32x1xf32> to vector<32x128xf32>
    %13 = vector.broadcast %11 : vector<1x128xf32> to vector<32x128xf32>
    %14 = arith.mulf %12, %13 : vector<32x128xf32>
    %15 = arith.addf %9, %14 : vector<32x128xf32>
    %16 = vector.extract_strided_slice %0 {offsets = [0, 2], sizes = [32, 1], strides = [1, 1]} : vector<32x4xf32> to vector<32x1xf32>
    %17 = vector.extract_strided_slice %4 {offsets = [2, 0], sizes = [1, 128], strides = [1, 1]} : vector<4x128xf32> to vector<1x128xf32>
    %18 = vector.broadcast %16 : vector<32x1xf32> to vector<32x128xf32>
    %19 = vector.broadcast %17 : vector<1x128xf32> to vector<32x128xf32>
    %20 = arith.mulf %18, %19 : vector<32x128xf32>
    %21 = arith.addf %15, %20 : vector<32x128xf32>
    %22 = vector.extract_strided_slice %0 {offsets = [0, 3], sizes = [32, 1], strides = [1, 1]} : vector<32x4xf32> to vector<32x1xf32>
    %23 = vector.extract_strided_slice %4 {offsets = [3, 0], sizes = [1, 128], strides = [1, 1]} : vector<4x128xf32> to vector<1x128xf32>
    %24 = vector.broadcast %22 : vector<32x1xf32> to vector<32x128xf32>
    %25 = vector.broadcast %23 : vector<1x128xf32> to vector<32x128xf32>
    %26 = arith.mulf %24, %25 : vector<32x128xf32>
    %27 = arith.addf %21, %26 : vector<32x128xf32>
    %28 = vector.broadcast %1 : vector<32x1xf32> to vector<32x128xf32>
    %29 = arith.addf %27, %28 : vector<32x128xf32>
    %cst = arith.constant 0.000000e+00 : f32
    %30 = vector.broadcast %cst : f32 to vector<32x128xf32>
    %31 = arith.maximumf %29, %30 : vector<32x128xf32>
    %32 = vector.broadcast %2 : vector<32x1xf32> to vector<32x128xf32>
    %33 = arith.mulf %31, %32 : vector<32x128xf32>
    %cst_8 = arith.constant dense<0.000000e+00> : vector<128xf32>
    %34 = vector.multi_reduction <add>, %33, %cst_8 [0] : vector<32x128xf32> to vector<128xf32>
    %35 = vector.shape_cast %34 : vector<128xf32> to vector<1x128xf32>
    %36 = vector.broadcast %3 : f32 to vector<1x128xf32>
    %37 = arith.addf %35, %36 : vector<1x128xf32>
    %c0_9 = arith.constant 0 : index
    %c0_10 = arith.constant 0 : index
    %38 = vector.load %arg5[%c0_9, %c0_10] : memref<1x128xf32, #tpu.memory_space<vmem>>, vector<1x128xf32>
    tpu.vector_store %arg5[%c0_9, %c0_10], %37 {strides = array<i32>} : memref<1x128xf32, #tpu.memory_space<vmem>>, vector<1x128xf32>,
    return
  }
  func.func @transform_0(%arg0: i32) -> (i32, i32) {
    %c0_i32 = arith.constant 0 : i32
    %c0_i32_0 = arith.constant 0 : i32
    return %c0_i32, %arg0 : i32, i32
  }
  func.func @transform_1(%arg0: i32) -> (i32, i32) {
    %c0_i32 = arith.constant 0 : i32
    %c0_i32_0 = arith.constant 0 : i32
    %c0_i32_1 = arith.constant 0 : i32
    return %c0_i32, %c0_i32_0 : i32, i32
  }
  func.func @transform_2(%arg0: i32) -> (i32, i32) {
    %c0_i32 = arith.constant 0 : i32
    %c0_i32_0 = arith.constant 0 : i32
    %c0_i32_1 = arith.constant 0 : i32
    return %c0_i32, %c0_i32_0 : i32, i32
  }
  func.func @transform_3(%arg0: i32) -> (i32, i32) {
    %c0_i32 = arith.constant 0 : i32
    %c0_i32_0 = arith.constant 0 : i32
    %c0_i32_1 = arith.constant 0 : i32
    return %c0_i32, %c0_i32_0 : i32, i32
  }
  func.func @transform_4(%arg0: i32) -> (i32, i32) {
    %c0_i32 = arith.constant 0 : i32
    %c0_i32_0 = arith.constant 0 : i32
    return %c0_i32, %arg0 : i32, i32
  }
}

</mosaic_0001>

<llo_original>
// kernel: tpu_custom_call.1
$region0: #{tpu_custom_call.1}
  #allocation0 [shape = 'u32[]', space=smem, size = 0x4, offset = 0x4, fixed_abs, tag = 'smem constant byte address 0x4 - core index']
  #allocation1 [shape = 'u32[144,128]{1,0:T(1,128)}', space=vmem, size = 0x12000, scoped, tag = 'internal scratch']
  #allocation2 [shape = 'f32[1,1]{1,0:T(1,128)S(6)}', space=smem, size = 0x200, scoped, tag = 'scoped memory for tpu_custom_call.1']
  %s0 = inlined_call_operand.vmem [shape: f32[4,128], index: 0, kind: input, shape index: {}]
  %s1 = inlined_call_operand.vmem [shape: f32[32,4], index: 1, kind: input, shape index: {}]
  %s2 = inlined_call_operand.vmem [shape: f32[32,2], index: 2, kind: input, shape index: {}]
  %s3 = inlined_call_operand.<no memory space> [shape: f32[1,1], index: 3, kind: input, shape index: {}]
  %s4 = inlined_call_operand.hbm [shape: f32[1,128], index: 4, kind: output, shape index: {}]
  %s5 = sld [smem:[#allocation0]]
  $region26: #{tpu_custom_call.1} parent=0
    _
  %s7 = ssub.s32 1, %s5
  %s8 = scalar_select 0, %s7, %s5
  %9 = sst [smem:[#allocation2]] %s3
  $region1: #{tpu_custom_call.1} parent=0
    #allocation3 [shape = 'u8[512]{0}', space=vmem, size = 0x400, scoped, tag = 'output window, operand 0, single buffered']
    #allocation4 [shape = 's32[1]{0}', space=sflag, size = 0x4, scoped, tag = 'scoped memory for tpu_custom_call.1']
    %10 = vsyncpa [#allocation4], 0
    // Predicated region
    $region2: #{tpu_custom_call.1} parent=1 // pred_check
      _
    $region3: #{tpu_custom_call.1} parent=1 // pred_check_branch
      %12 = sbr.rel (0) target = $region5
    $region4: #{tpu_custom_call.1} parent=1 // pred_region
      _
    $region5: #{tpu_custom_call.1} parent=1 // pred_fallthru
      _
    // Predicated region
    $region6: #{tpu_custom_call.1} parent=1 // pred_check
      _
    $region7: #{tpu_custom_call.1} parent=1 // pred_check_branch
      %14 = sbr.rel (0) target = $region9
    $region8: #{tpu_custom_call.1} parent=1 // pred_region
      _
    $region9: #{tpu_custom_call.1} parent=1 // pred_fallthru
      _
    // Predicated region
    $region10: #{tpu_custom_call.1} parent=1 // pred_check
      _
    $region11: #{tpu_custom_call.1} parent=1 // pred_check_branch
      %16 = sbr.rel (0) target = $region13
    $region12: #{tpu_custom_call.1} parent=1 // pred_region
      _
    $region13: #{tpu_custom_call.1} parent=1 // pred_fallthru
      _
    // Predicated region
    $region14: #{tpu_custom_call.1} parent=1 // pred_check
      _
    $region15: #{tpu_custom_call.1} parent=1 // pred_check_branch
      %18 = sbr.rel (0) target = $region17
    $region16: #{tpu_custom_call.1} parent=1 // pred_region
      _
    $region17: #{tpu_custom_call.1} parent=1 // pred_fallthru
      _
    %v19 = vld [vmem:[%s1] sm:$0xff]
    %v20 = vld [vmem:[%s1 + $0x8] sm:$0xff]
    %v21 = vld [vmem:[%s1 + $0x10] sm:$0xff]
    %v22 = vld [vmem:[%s1 + $0x18] sm:$0xff]
    %v23 = vld [vmem:[%s2] sm:$0xff]
    %v24 = vld [vmem:[%s2 + $0x8] sm:$0xff]
    %v25 = vld [vmem:[%s2 + $0x10] sm:$0xff]
    %v26 = vld [vmem:[%s2 + $0x18] sm:$0xff]
    %s27 = sld [smem:[#allocation2]]
    %v28 = vld [vmem:[%s0] sm:$0xf]
    %30 = vset.pattern.permute.xlu0 0
    %31 = vperm.xlu0 %30, %v19
    %v32 = vpop.permute.xlu0 %31
    %35 = vset.pattern.permute.xlu0 0
    %36 = vperm.xlu0 %35, %v20
    %v37 = vpop.permute.xlu0 %36
    %40 = vset.pattern.permute.xlu0 0
    %41 = vperm.xlu0 %40, %v21
    %v42 = vpop.permute.xlu0 %41
    %45 = vset.pattern.permute.xlu0 0
    %46 = vperm.xlu0 %45, %v22
    %v47 = vpop.permute.xlu0 %46
    %v49 = vlaneseq
    %v50 = vshrl.u32 %v49, 7
    %v51 = vsub.s32 0, %v50
    %v52 = vrot.slane %v28, %v51
    %v53 = vmul.f32 %v32, %v52
    %v54 = vmul.f32 %v37, %v52
    %v55 = vmul.f32 %v42, %v52
    %v56 = vmul.f32 %v47, %v52
    %57 = vset.pattern.permute.xlu0 1
    %58 = vperm.xlu0 %57, %v19
    %v59 = vpop.permute.xlu0 %58
    %61 = vset.pattern.permute.xlu0 1
    %62 = vperm.xlu0 %61, %v20
    %v63 = vpop.permute.xlu0 %62
    %65 = vset.pattern.permute.xlu0 1
    %66 = vperm.xlu0 %65, %v21
    %v67 = vpop.permute.xlu0 %66
    %69 = vset.pattern.permute.xlu0 1
    %70 = vperm.xlu0 %69, %v22
    %v71 = vpop.permute.xlu0 %70
    %v73 = vlaneseq
    %v74 = vshrl.u32 %v73, 7
    %v75 = vsub.s32 1, %v74
    %v76 = vrot.slane %v28, %v75
    %v77 = vmul.f32 %v59, %v76
    %v78 = vmul.f32 %v63, %v76
    %v79 = vmul.f32 %v67, %v76
    %v80 = vmul.f32 %v71, %v76
    %v81 = vadd.f32 %v53, %v77
    %v82 = vadd.f32 %v54, %v78
    %v83 = vadd.f32 %v55, %v79
    %v84 = vadd.f32 %v56, %v80
    %85 = vset.pattern.permute.xlu0 2
    %86 = vperm.xlu0 %85, %v19
    %v87 = vpop.permute.xlu0 %86
    %89 = vset.pattern.permute.xlu0 2
    %90 = vperm.xlu0 %89, %v20
    %v91 = vpop.permute.xlu0 %90
    %93 = vset.pattern.permute.xlu0 2
    %94 = vperm.xlu0 %93, %v21
    %v95 = vpop.permute.xlu0 %94
    %97 = vset.pattern.permute.xlu0 2
    %98 = vperm.xlu0 %97, %v22
    %v99 = vpop.permute.xlu0 %98
    %v101 = vlaneseq
    %v102 = vshrl.u32 %v101, 7
    %v103 = vsub.s32 2, %v102
    %v104 = vrot.slane %v28, %v103
    %v105 = vmul.f32 %v87, %v104
    %v106 = vmul.f32 %v91, %v104
    %v107 = vmul.f32 %v95, %v104
    %v108 = vmul.f32 %v99, %v104
    %v109 = vadd.f32 %v81, %v105
    %v110 = vadd.f32 %v82, %v106
    %v111 = vadd.f32 %v83, %v107
    %v112 = vadd.f32 %v84, %v108
    %113 = vset.pattern.permute.xlu0 3
    %114 = vperm.xlu0 %113, %v19
    %v115 = vpop.permute.xlu0 %114
    %117 = vset.pattern.permute.xlu0 3
    %118 = vperm.xlu0 %117, %v20
    %v119 = vpop.permute.xlu0 %118
    %121 = vset.pattern.permute.xlu0 3
    %122 = vperm.xlu0 %121, %v21
    %v123 = vpop.permute.xlu0 %122
    %125 = vset.pattern.permute.xlu0 3
    %126 = vperm.xlu0 %125, %v22
    %v127 = vpop.permute.xlu0 %126
    %v129 = vlaneseq
    %v130 = vshrl.u32 %v129, 7
    %v131 = vsub.s32 3, %v130
    %v132 = vrot.slane %v28, %v131
    %v133 = vmul.f32 %v115, %v132
    %v134 = vmul.f32 %v119, %v132
    %v135 = vmul.f32 %v123, %v132
    %v136 = vmul.f32 %v127, %v132
    %v137 = vadd.f32 %v109, %v133
    %v138 = vadd.f32 %v110, %v134
    %v139 = vadd.f32 %v111, %v135
    %v140 = vadd.f32 %v112, %v136
    %142 = vset.pattern.permute.xlu0 0
    %143 = vperm.xlu0 %142, %v23
    %v144 = vpop.permute.xlu0 %143
    %147 = vset.pattern.permute.xlu0 0
    %148 = vperm.xlu0 %147, %v24
    %v149 = vpop.permute.xlu0 %148
    %152 = vset.pattern.permute.xlu0 0
    %153 = vperm.xlu0 %152, %v25
    %v154 = vpop.permute.xlu0 %153
    %157 = vset.pattern.permute.xlu0 0
    %158 = vperm.xlu0 %157, %v26
    %v159 = vpop.permute.xlu0 %158
    %v161 = vadd.f32 %v137, %v144
    %v162 = vadd.f32 %v138, %v149
    %v163 = vadd.f32 %v139, %v154
    %v164 = vadd.f32 %v140, %v159
    %v165 = vmax.f32 %v161, 0.0
    %v166 = vmax.f32 %v162, 0.0
    %v167 = vmax.f32 %v163, 0.0
    %v168 = vmax.f32 %v164, 0.0
    %169 = vset.pattern.permute.xlu0 1
    %170 = vperm.xlu0 %169, %v23
    %v171 = vpop.permute.xlu0 %170
    %173 = vset.pattern.permute.xlu0 1
    %174 = vperm.xlu0 %173, %v24
    %v175 = vpop.permute.xlu0 %174
    %177 = vset.pattern.permute.xlu0 1
    %178 = vperm.xlu0 %177, %v25
    %v179 = vpop.permute.xlu0 %178
    %181 = vset.pattern.permute.xlu0 1
    %182 = vperm.xlu0 %181, %v26
    %v183 = vpop.permute.xlu0 %182
    %v185 = vmul.f32 %v165, %v171
    %v186 = vmul.f32 %v166, %v175
    %v187 = vmul.f32 %v167, %v179
    %v188 = vmul.f32 %v168, %v183
    %v189 = vadd.f32 %v185, %v186
    %v190 = vadd.f32 %v189, %v187
    %v191 = vadd.f32 %v190, %v188
    %v192 = vrot.slane %v191, 4
    %v193 = vadd.f32 %v191, %v192
    %v194 = vrot.slane %v193, 2
    %v195 = vadd.f32 %v193, %v194
    %v196 = vrot.slane %v195, 1
    %v197 = vadd.f32 %v195, %v196
    %v198 = vstv %s27
    %v199 = vadd.f32 %v197, %v198
    %200 = vst [vmem:[#allocation3] sm:$0x1] %v199
    // Predicated region
    $region18: #{tpu_custom_call.1} parent=1 // pred_check
      _
    $region19: #{tpu_custom_call.1} parent=1 // pred_check_branch
      %202 = sbr.rel (0) target = $region21
    $region20: #{tpu_custom_call.1} parent=1 // pred_region
      %s204 = ssub.s32 16, 16
      %205 = vsyncadd [#allocation4], %s204
      %s207 = sshll.u32 [#allocation3], 4
      %s208 = int_to_ptr.vmem [resolvable:$true] %s207
      %210 = dma.vmem_to_hbm [thread:$0]  %s208, 16, %s4, [#allocation4]
    $region21: #{tpu_custom_call.1} parent=1 // pred_fallthru
      _
    // Predicated region
    $region22: #{tpu_custom_call.1} parent=1 // pred_check
      _
    $region23: #{tpu_custom_call.1} parent=1 // pred_check_branch
      %212 = sbr.rel (0) target = $region25
    $region24: #{tpu_custom_call.1} parent=1 // pred_region
      %213 = dma.done [#allocation4], 16
    $region25: #{tpu_custom_call.1} parent=1 // pred_fallthru
      _
    %214 = vsyncpa [#allocation4], 1

</llo_original>
